<compile_context>
chip_gen: v7x
topology: tpu7x:2x2x1
jax: 0.10.0
libtpu: 0.0.40
codegen_flags: <defaults>
</compile_context>

<pallas_src>
import jax
import jax.numpy as jnp
from jax.experimental import pallas as pl
from jax.experimental.pallas import tpu as pltpu

BN_EPS = 1e-5


# ----------------------------- kernels -------------------------------------


def _se_kernel_chw(x_ref,            # (Bt, C, HW)  spatial on the lane axis
                   w1_ref, b1_ref,   # (C, Ch), (1, Ch)  conv1 (BN1 + 1/HW folded, transposed)
                   w2_ref, b2_ref,   # (Ch, C), (1, C)   conv2 (BN2 folded, transposed)
                   o_ref):           # (Bt, C, HW)
    # squeeze: spatial sum (1/HW is folded into w1), f32 accumulation
    pooled = jnp.sum(x_ref[...], axis=-1, dtype=jnp.float32)              # (Bt, C)
    # excite: tiny matmuls + sigmoid — completely hidden under the HBM DMA
    h = jnp.dot(pooled, w1_ref[...], preferred_element_type=jnp.float32) + b1_ref[...]
    h = jnp.maximum(h, 0.0)
    g = jnp.dot(h, w2_ref[...], preferred_element_type=jnp.float32) + b2_ref[...]
    se = jax.nn.sigmoid(g).astype(o_ref.dtype)                            # (Bt, C)
    # scale: re-read x_ref so Mosaic can strip-mine the multiply
    o_ref[...] = x_ref[...] * se[:, :, None]


def _se_kernel_hwc(x_ref,            # (Bt, HW, C)  channels on the lane axis
                   w1_ref, b1_ref,
                   w2_ref, b2_ref,
                   o_ref):           # (Bt, HW, C)
    pooled = jnp.sum(x_ref[...], axis=1, dtype=jnp.float32)               # (Bt, C)
    h = jnp.dot(pooled, w1_ref[...], preferred_element_type=jnp.float32) + b1_ref[...]
    h = jnp.maximum(h, 0.0)
    g = jnp.dot(h, w2_ref[...], preferred_element_type=jnp.float32) + b2_ref[...]
    se = jax.nn.sigmoid(g).astype(o_ref.dtype)                            # (Bt, C)
    o_ref[...] = x_ref[...] * se[:, None, :]


# ----------------------------- wrapper --------------------------------------


def _fold_bn(w, b, gamma, beta, mean, var):
    """Fold eval-mode BatchNorm into the preceding 1x1 conv (rows of w = out channels)."""
    s = gamma * jax.lax.rsqrt(var + BN_EPS)                                # (out,)
    return w * s[:, None], (b - mean) * s + beta


def _pick_batch_tile(B, per_batch_bytes, vmem_capacity):
    """Batches per grid step: MB-scale DMAs, VMEM-safe double-buffering, enough grid steps."""
    target_tile_bytes = 4 * 1024 * 1024
    bt = max(1, min(B, target_tile_bytes // max(1, per_batch_bytes)))
    # 2 input + 2 output double-buffers must fit in ~40% of physical VMEM
    bt = min(bt, max(1, int(0.4 * vmem_capacity) // max(1, 4 * per_batch_bytes)))
    # keep >= 2 (ideally >= 4) grid steps so the parallel batch axis can shard
    # across both TensorCores on v7x; a no-op on single-TC v5e/v6e
    min_steps = 4 if B >= 4 else (2 if B >= 2 else 1)
    bt = min(bt, max(1, B // min_steps))
    while B % bt != 0:   # largest divisor of B not exceeding bt
        bt -= 1
    return bt


def se_block_pallas(x_nchw, params):
    """x_nchw: (B, C, H, W).  params: dict of SEBlock parameters."""
    B, C, H, W = x_nchw.shape
    Ch = params["w1"].shape[0]          # C // r
    HW = H * W

    try:
        vmem_capacity = int(pltpu.get_tpu_info().vmem_capacity_bytes)
    except Exception:                   # fallback: size against the smallest (v7x) VMEM
        vmem_capacity = 64 * 1024 * 1024

    # Fold BN into conv weights/biases, pre-transpose, and fold 1/HW into conv1
    # so the in-kernel squeeze is a plain sum.
    w1f, b1f = _fold_bn(params["w1"].reshape(Ch, C), params["b1"],
                        params["bn1_gamma"], params["bn1_beta"],
                        params["bn1_mean"], params["bn1_var"])
    w2f, b2f = _fold_bn(params["w2"].reshape(C, Ch), params["b2"],
                        params["bn2_gamma"], params["bn2_beta"],
                        params["bn2_mean"], params["bn2_var"])
    w1t = w1f.T * (1.0 / HW)            # (C, Ch), 1/HW folded
    w2t = w2f.T                         # (Ch, C)
    b1r = b1f.reshape(1, Ch)
    b2r = b2f.reshape(1, C)

    # Layout: keep the lane (last) axis a multiple of 128 whenever possible.
    if HW % 128 == 0:
        layout = "chw"
    elif C % 128 == 0:
        layout = "hwc"
    else:
        layout = "chw" if HW >= C else "hwc"

    if layout == "chw":
        x_flat = x_nchw.reshape(B, C, HW)
        inner = (C, HW)
        kernel = _se_kernel_chw
    else:
        # TODO(synk): the channels-last transpose is done by XLA in the wrapper;
        # a real pipeline would feed NHWC activations directly to avoid it.
        x_flat = jnp.transpose(x_nchw.reshape(B, C, HW), (0, 2, 1))
        inner = (HW, C)
        kernel = _se_kernel_hwc

    itemsize = jnp.dtype(x_nchw.dtype).itemsize
    per_batch_bytes = C * HW * itemsize
    bt = _pick_batch_tile(B, per_batch_bytes, vmem_capacity)
    grid = (B // bt,)

    param_bytes = sum(int(a.size) * jnp.dtype(a.dtype).itemsize
                      for a in (w1t, b1r, w2t, b2r))
    # 2 in + 2 out double-buffered tiles + params + headroom, capped at ~85% of
    # physical VMEM (leaves compiler scratch headroom on v7x's 64 MiB).
    vmem_limit = int(min(int(0.85 * vmem_capacity),
                         max(4 * 1024 * 1024,
                             4 * bt * per_batch_bytes + 2 * param_bytes + 2 * 1024 * 1024)))

    cost = pl.CostEstimate(
        flops=int(B * (2 * C * HW + 4 * C * Ch)),     # pool + scale + two tiny matmuls
        transcendentals=int(B * C),                   # sigmoid
        bytes_accessed=int(2 * B * per_batch_bytes + param_bytes),
    )

    block = (bt,) + inner
    grid_spec = pltpu.PrefetchScalarGridSpec(
        num_scalar_prefetch=0,
        grid=grid,
        in_specs=[
            pl.BlockSpec(block, lambda b: (b, 0, 0)),        # x: bt batches per step
            pl.BlockSpec((C, Ch), lambda b: (0, 0)),          # folded conv1 weight
            pl.BlockSpec((1, Ch), lambda b: (0, 0)),          # folded conv1 bias
            pl.BlockSpec((Ch, C), lambda b: (0, 0)),          # folded conv2 weight
            pl.BlockSpec((1, C), lambda b: (0, 0)),           # folded conv2 bias
        ],
        out_specs=pl.BlockSpec(block, lambda b: (b, 0, 0)),
    )

    out = pl.pallas_call(
        kernel,
        out_shape=jax.ShapeDtypeStruct((B,) + inner, x_nchw.dtype),
        grid_spec=grid_spec,
        compiler_params=pltpu.CompilerParams(
            dimension_semantics=("parallel",),
            vmem_limit_bytes=vmem_limit,
        ),
        cost_estimate=cost,
    )(x_flat, w1t, b1r, w2t, b2r)

    if layout == "chw":
        return out.reshape(B, C, H, W)
    return jnp.transpose(out, (0, 2, 1)).reshape(B, C, H, W)


# ----------------------------- reference & test -----------------------------


def se_block_ref(x, p):
    """Pure-JAX reference (eval-mode BN)."""
    B, C, H, W = x.shape
    Ch = p["w1"].shape[0]
    pooled = jnp.mean(x, axis=(2, 3))                                   # (B, C)
    h = pooled @ p["w1"].reshape(Ch, C).T + p["b1"]
    h = (h - p["bn1_mean"]) * p["bn1_gamma"] / jnp.sqrt(p["bn1_var"] + BN_EPS) + p["bn1_beta"]
    h = jnp.maximum(h, 0.0)
    g = h @ p["w2"].reshape(C, Ch).T + p["b2"]
    g = (g - p["bn2_mean"]) * p["bn2_gamma"] / jnp.sqrt(p["bn2_var"] + BN_EPS) + p["bn2_beta"]
    se = jax.nn.sigmoid(g)
    return x * se[:, :, None, None]


def init_params(key, C, r=16):
    Ch = max(1, C // r)
    ks = jax.random.split(key, 12)
    return {
        # Conv2d weights have shape (out, in, 1, 1) in PyTorch; stored squeezed.
        "w1": jax.random.normal(ks[0], (Ch, C), jnp.float32) * 0.1,
        "b1": jax.random.normal(ks[1], (Ch,), jnp.float32) * 0.1,
        "bn1_gamma": 1.0 + 0.1 * jax.random.normal(ks[2], (Ch,), jnp.float32),
        "bn1_beta": 0.1 * jax.random.normal(ks[3], (Ch,), jnp.float32),
        "bn1_mean": 0.05 * jax.random.normal(ks[4], (Ch,), jnp.float32),
        "bn1_var": 0.5 + jax.random.uniform(ks[5], (Ch,), jnp.float32),
        "w2": jax.random.normal(ks[6], (C, Ch), jnp.float32) * 0.1,
        "b2": jax.random.normal(ks[7], (C,), jnp.float32) * 0.1,
        "bn2_gamma": 1.0 + 0.1 * jax.random.normal(ks[8], (C,), jnp.float32),
        "bn2_beta": 0.1 * jax.random.normal(ks[9], (C,), jnp.float32),
        "bn2_mean": 0.05 * jax.random.normal(ks[10], (C,), jnp.float32),
        "bn2_var": 0.5 + jax.random.uniform(ks[11], (C,), jnp.float32),
    }


if __name__ == "__main__":
    key = jax.random.PRNGKey(0)

    # Case 1: HW multiple of 128 -> (B, C, HW) lane-dense layout.
    k_x, k_p, k_x2, k_p2 = jax.random.split(key, 4)
    B, C, H, W, r = 2, 32, 16, 16, 16            # Ch = 2, HW = 256
    x = jax.random.normal(k_x, (B, C, H, W), jnp.float32)
    params = init_params(k_p, C, r)
    out = jax.block_until_ready(se_block_pallas(x, params))
    ref = se_block_ref(x, params)
    assert out.shape == (B, C, H, W)
    assert jnp.allclose(out, ref, atol=1e-5, rtol=1e-5), "mismatch vs reference (chw)"

    # Case 2: HW = 49 (not a multiple of 128), C = 128 -> (B, HW, C) layout path.
    B2, C2, H2, W2, r2 = 4, 128, 7, 7, 16        # Ch = 8, HW = 49
    x2 = jax.random.normal(k_x2, (B2, C2, H2, W2), jnp.float32)
    params2 = init_params(k_p2, C2, r2)
    out2 = jax.block_until_ready(se_block_pallas(x2, params2))
    ref2 = se_block_ref(x2, params2)
    assert out2.shape == (B2, C2, H2, W2)
    assert jnp.allclose(out2, ref2, atol=1e-5, rtol=1e-5), "mismatch vs reference (hwc)"

    print("KERNEL_OK")
</pallas_src>

<mosaic_0001>
module attributes {stable_mosaic.version = 11 : i64} {
  func.func @_se_kernel_chw(%arg0: i32, %arg1: memref<1x32x256xf32, #tpu.memory_space<vmem>>, %arg2: memref<32x2xf32, #tpu.memory_space<vmem>>, %arg3: memref<1x2xf32, #tpu.memory_space<vmem>>, %arg4: memref<2x32xf32, #tpu.memory_space<vmem>>, %arg5: memref<1x32xf32, #tpu.memory_space<vmem>>, %arg6: memref<1x32x256xf32, #tpu.memory_space<vmem>>) attributes {dimension_semantics = [#tpu.dimension_semantics<parallel>], iteration_bounds = array<i64: 2>, scalar_prefetch = 0 : i64, scratch_operands = 0 : i64, tpu.core_type = #tpu.core_type<tc>, window_params = [{transform_indices = @transform_0, window_bounds = array<i64: 1, 32, 256>}, {pipeline_mode = #tpu.pipeline_mode<synchronous>, transform_indices = @transform_1, window_bounds = array<i64: 32, 2>}, {pipeline_mode = #tpu.pipeline_mode<synchronous>, transform_indices = @transform_2, window_bounds = array<i64: 1, 2>}, {pipeline_mode = #tpu.pipeline_mode<synchronous>, transform_indices = @transform_3, window_bounds = array<i64: 2, 32>}, {pipeline_mode = #tpu.pipeline_mode<synchronous>, transform_indices = @transform_4, window_bounds = array<i64: 1, 32>}, {transform_indices = @transform_5, window_bounds = array<i64: 1, 32, 256>}]} {
    %c0 = arith.constant 0 : index
    %c0_0 = arith.constant 0 : index
    %c0_1 = arith.constant 0 : index
    %0 = vector.load %arg1[%c0, %c0_0, %c0_1] : memref<1x32x256xf32, #tpu.memory_space<vmem>>, vector<1x32x256xf32>
    %cst = arith.constant dense<0.000000e+00> : vector<1x32xf32>
    %1 = vector.multi_reduction <add>, %0, %cst [2] : vector<1x32x256xf32> to vector<1x32xf32>
    %c0_2 = arith.constant 0 : index
    %c0_3 = arith.constant 0 : index
    %2 = vector.load %arg2[%c0_2, %c0_3] : memref<32x2xf32, #tpu.memory_space<vmem>>, vector<32x2xf32>
    %cst_4 = arith.constant dense<0.000000e+00> : vector<1x2xf32>
    %3 = tpu.matmul %1, %2, %cst_4 {dimension_numbers = #tpu.dot_dimension_numbers<[1], [0], [0], [1], [0, 0, 1, 1], [], []>} : vector<1x32xf32>, vector<32x2xf32>, vector<1x2xf32> -> vector<1x2xf32>
    %c0_5 = arith.constant 0 : index
    %c0_6 = arith.constant 0 : index
    %4 = vector.load %arg3[%c0_5, %c0_6] : memref<1x2xf32, #tpu.memory_space<vmem>>, vector<1x2xf32>
    %5 = arith.addf %3, %4 : vector<1x2xf32>
    %cst_7 = arith.constant 0.000000e+00 : f32
    %6 = vector.broadcast %cst_7 : f32 to vector<1x2xf32>
    %7 = arith.maximumf %5, %6 : vector<1x2xf32>
    %c0_8 = arith.constant 0 : index
    %c0_9 = arith.constant 0 : index
    %8 = vector.load %arg4[%c0_8, %c0_9] : memref<2x32xf32, #tpu.memory_space<vmem>>, vector<2x32xf32>
    %cst_10 = arith.constant dense<0.000000e+00> : vector<1x32xf32>
    %9 = tpu.matmul %7, %8, %cst_10 {dimension_numbers = #tpu.dot_dimension_numbers<[1], [0], [0], [1], [0, 0, 1, 1], [], []>} : vector<1x2xf32>, vector<2x32xf32>, vector<1x32xf32> -> vector<1x32xf32>
    %c0_11 = arith.constant 0 : index
    %c0_12 = arith.constant 0 : index
    %10 = vector.load %arg5[%c0_11, %c0_12] : memref<1x32xf32, #tpu.memory_space<vmem>>, vector<1x32xf32>
    %11 = arith.addf %9, %10 : vector<1x32xf32>
    %12 = arith.negf %11 : vector<1x32xf32>
    %13 = math.exp %12 : vector<1x32xf32>
    %cst_13 = arith.constant 1.000000e+00 : f32
    %14 = vector.broadcast %cst_13 : f32 to vector<1x32xf32>
    %15 = arith.addf %14, %13 : vector<1x32xf32>
    %16 = arith.divf %14, %15 : vector<1x32xf32>
    %c0_14 = arith.constant 0 : index
    %c0_15 = arith.constant 0 : index
    %c0_16 = arith.constant 0 : index
    %17 = vector.load %arg1[%c0_14, %c0_15, %c0_16] : memref<1x32x256xf32, #tpu.memory_space<vmem>>, vector<1x32x256xf32>
    %18 = vector.shape_cast %16 : vector<1x32xf32> to vector<1x32x1xf32>
    %19 = vector.broadcast %18 : vector<1x32x1xf32> to vector<1x32x256xf32>
    %20 = arith.mulf %17, %19 : vector<1x32x256xf32>
    %c0_17 = arith.constant 0 : index
    %c0_18 = arith.constant 0 : index
    %c0_19 = arith.constant 0 : index
    %21 = vector.load %arg6[%c0_17, %c0_18, %c0_19] : memref<1x32x256xf32, #tpu.memory_space<vmem>>, vector<1x32x256xf32>
    tpu.vector_store %arg6[%c0_17, %c0_18, %c0_19], %20 {strides = array<i32>} : memref<1x32x256xf32, #tpu.memory_space<vmem>>, vector<1x32x256xf32>,
    return
  }
  func.func @transform_0(%arg0: i32) -> (i32, i32, i32) {
    %c0_i32 = arith.constant 0 : i32
    %c0_i32_0 = arith.constant 0 : i32
    %c0_i32_1 = arith.constant 0 : i32
    return %arg0, %c0_i32, %c0_i32_0 : i32, i32, i32
  }
  func.func @transform_1(%arg0: i32) -> (i32, i32) {
    %c0_i32 = arith.constant 0 : i32
    %c0_i32_0 = arith.constant 0 : i32
    %c0_i32_1 = arith.constant 0 : i32
    return %c0_i32, %c0_i32_0 : i32, i32
  }
  func.func @transform_2(%arg0: i32) -> (i32, i32) {
    %c0_i32 = arith.constant 0 : i32
    %c0_i32_0 = arith.constant 0 : i32
    %c0_i32_1 = arith.constant 0 : i32
    return %c0_i32, %c0_i32_0 : i32, i32
  }
  func.func @transform_3(%arg0: i32) -> (i32, i32) {
    %c0_i32 = arith.constant 0 : i32
    %c0_i32_0 = arith.constant 0 : i32
    %c0_i32_1 = arith.constant 0 : i32
    return %c0_i32, %c0_i32_0 : i32, i32
  }
  func.func @transform_4(%arg0: i32) -> (i32, i32) {
    %c0_i32 = arith.constant 0 : i32
    %c0_i32_0 = arith.constant 0 : i32
    %c0_i32_1 = arith.constant 0 : i32
    return %c0_i32, %c0_i32_0 : i32, i32
  }
  func.func @transform_5(%arg0: i32) -> (i32, i32, i32) {
    %c0_i32 = arith.constant 0 : i32
    %c0_i32_0 = arith.constant 0 : i32
    %c0_i32_1 = arith.constant 0 : i32
    return %arg0, %c0_i32, %c0_i32_0 : i32, i32, i32
  }
}

</mosaic_0001>

<llo_original>
// kernel: tpu_custom_call.1
$region0: #{tpu_custom_call.1}
  #allocation0 [shape = 'u32[]', space=smem, size = 0x4, offset = 0x4, fixed_abs, tag = 'smem constant byte address 0x4 - core index']
  #allocation1 [shape = 'u32[144,128]{1,0:T(1,128)}', space=vmem, size = 0x12000, scoped, tag = 'internal scratch']
  %s0 = inlined_call_operand.hbm [shape: f32[2,32,256], index: 0, kind: input, shape index: {}]
  %s1 = inlined_call_operand.vmem [shape: f32[32,2], index: 1, kind: input, shape index: {}]
  %s2 = inlined_call_operand.vmem [shape: f32[1,2], index: 2, kind: input, shape index: {}]
  %s3 = inlined_call_operand.vmem [shape: f32[2,32], index: 3, kind: input, shape index: {}]
  %s4 = inlined_call_operand.vmem [shape: f32[1,32], index: 4, kind: input, shape index: {}]
  %s5 = inlined_call_operand.hbm [shape: f32[2,32,256], index: 5, kind: output, shape index: {}]
  %s6 = sld [smem:[#allocation0]]
  $region57: #{tpu_custom_call.1} parent=0
    _
  %s8 = ssub.s32 1, %s6
  %s9 = scalar_select 0, %s8, %s6
  $region1: #{tpu_custom_call.1} parent=0
    #allocation2 [shape = 'u8[65536]{0}', space=vmem, size = 0x10000, scoped, tag = 'input window, operand 0']
    #allocation3 [shape = 's32[2]{0}', space=sflag, size = 0x8, scoped, tag = 'scoped memory for tpu_custom_call.1']
    #allocation4 [shape = 's32[2]{0}', space=sflag, size = 0x8, scoped, tag = 'scoped memory for tpu_custom_call.1']
    #allocation5 [shape = 'u8[65536]{0}', space=vmem, size = 0x10000, scoped, tag = 'output window, operand 0']
    %10 = vsyncpa [#allocation3], 0
    %s11 = scalar_lea.sflag [#allocation3], 1
    %12 = vsyncpa %s11, 0
    %13 = vsyncpa [#allocation4], 0
    %s14 = scalar_lea.sflag [#allocation4], 1
    %15 = vsyncpa %s14, 0
    loop: start=0, step=1, limit=4
    $region2: #{tpu_custom_call.1} parent=1 // loop_pre_header
      _
    $region3: #{tpu_custom_call.1} parent=1 // loop_header
      %s17 = sphi 0, %s21
      %p18 = scmp.ge.s32.totalorder %s17, 4
      %s27 = sphi 0, %s29
      %s30 = sphi 0, %s27
      %s31 = sphi 0, %s30
      %s47 = sphi 0, %s31
      %s51 = sphi 0, %s51
      %s53 = sphi 0, %s51
      %s54 = sphi 0, %s53
      %s68 = sphi 0, %s54
      %s72 = sphi 0, %s72
      %s74 = sphi 0, %s72
      %s75 = sphi 0, %s74
      %s89 = sphi 0, %s75
      %s93 = sphi 0, %s93
      %s95 = sphi 0, %s93
      %s96 = sphi 0, %s95
      %s110 = sphi 0, %s96
      %s114 = sphi 0, %s114
      %s116 = sphi 0, %s114
      %s117 = sphi 0, %s116
      %s131 = sphi 0, %s117
      %s137 = sphi 0, %s139
      %s140 = sphi 0, %s137
      %s141 = sphi 0, %s140
      %s157 = sphi 0, %s141
    $region4: #{tpu_custom_call.1} parent=1 // loop_header_branch
      %20 = sbr.rel (%p18) target = $region8
    $region5: #{tpu_custom_call.1} parent=1 // loop_body
      %s22 = ssub.s32 %s17, 1
      %s23 = ssub.s32 %s17, 2
      %s24 = sadd.s32 %s17, 1
      %s25 = ssub.s32 %s17, %s24
      %p26 = scmp.eq.s32.totalorder %s25, 0
      %s28 = sadd.s32 %s27, 1
      %s29 = scalar_select %p26, %s27, %s28
      %p32 = pneg %p26
      %p33 = scmp.eq.s32.totalorder %s17, 1
      %p34 = por %p32, %p33
      %p35 = scmp.ne.s32.totalorder %s27, %s30
      %p36 = scmp.eq.s32.totalorder %s17, 0
      %p37 = por %p35, %p36
      %p38 = scmp.ne.s32.totalorder %s27, %s30
      %p39 = scmp.eq.s32.totalorder %s22, 1
      %p40 = por %p38, %p39
      %p41 = scmp.ne.s32.totalorder %s30, %s31
      %p42 = scmp.eq.s32.totalorder %s22, 0
      %p43 = por %p41, %p42
      %p44 = scmp.ne.s32.totalorder %s30, %s31
      %p45 = scmp.eq.s32.totalorder %s23, 1
      %p46 = por %p44, %p45
      %p48 = scmp.ne.s32.totalorder %s31, %s47
      %p49 = scmp.eq.s32.totalorder %s23, 0
      %p50 = por %p48, %p49
      %s52 = sadd.s32 %s51, 1
      %p55 = scmp.eq.s32.totalorder %s17, 1
      %p56 = scmp.ne.s32.totalorder %s51, %s53
      %p57 = scmp.eq.s32.totalorder %s17, 0
      %p58 = por %p56, %p57
      %p59 = scmp.ne.s32.totalorder %s51, %s53
      %p60 = scmp.eq.s32.totalorder %s22, 1
      %p61 = por %p59, %p60
      %p62 = scmp.ne.s32.totalorder %s53, %s54
      %p63 = scmp.eq.s32.totalorder %s22, 0
      %p64 = por %p62, %p63
      %p65 = scmp.ne.s32.totalorder %s53, %s54
      %p66 = scmp.eq.s32.totalorder %s23, 1
      %p67 = por %p65, %p66
      %p69 = scmp.ne.s32.totalorder %s54, %s68
      %p70 = scmp.eq.s32.totalorder %s23, 0
      %p71 = por %p69, %p70
      %s73 = sadd.s32 %s72, 1
      %p76 = scmp.eq.s32.totalorder %s17, 1
      %p77 = scmp.ne.s32.totalorder %s72, %s74
      %p78 = scmp.eq.s32.totalorder %s17, 0
      %p79 = por %p77, %p78
      %p80 = scmp.ne.s32.totalorder %s72, %s74
      %p81 = scmp.eq.s32.totalorder %s22, 1
      %p82 = por %p80, %p81
      %p83 = scmp.ne.s32.totalorder %s74, %s75
      %p84 = scmp.eq.s32.totalorder %s22, 0
      %p85 = por %p83, %p84
      %p86 = scmp.ne.s32.totalorder %s74, %s75
      %p87 = scmp.eq.s32.totalorder %s23, 1
      %p88 = por %p86, %p87
      %p90 = scmp.ne.s32.totalorder %s75, %s89
      %p91 = scmp.eq.s32.totalorder %s23, 0
      %p92 = por %p90, %p91
      %s94 = sadd.s32 %s93, 1
      %p97 = scmp.eq.s32.totalorder %s17, 1
      %p98 = scmp.ne.s32.totalorder %s93, %s95
      %p99 = scmp.eq.s32.totalorder %s17, 0
      %p100 = por %p98, %p99
      %p101 = scmp.ne.s32.totalorder %s93, %s95
      %p102 = scmp.eq.s32.totalorder %s22, 1
      %p103 = por %p101, %p102
      %p104 = scmp.ne.s32.totalorder %s95, %s96
      %p105 = scmp.eq.s32.totalorder %s22, 0
      %p106 = por %p104, %p105
      %p107 = scmp.ne.s32.totalorder %s95, %s96
      %p108 = scmp.eq.s32.totalorder %s23, 1
      %p109 = por %p107, %p108
      %p111 = scmp.ne.s32.totalorder %s96, %s110
      %p112 = scmp.eq.s32.totalorder %s23, 0
      %p113 = por %p111, %p112
      %s115 = sadd.s32 %s114, 1
      %p118 = scmp.eq.s32.totalorder %s17, 1
      %p119 = scmp.ne.s32.totalorder %s114, %s116
      %p120 = scmp.eq.s32.totalorder %s17, 0
      %p121 = por %p119, %p120
      %p122 = scmp.ne.s32.totalorder %s114, %s116
      %p123 = scmp.eq.s32.totalorder %s22, 1
      %p124 = por %p122, %p123
      %p125 = scmp.ne.s32.totalorder %s116, %s117
      %p126 = scmp.eq.s32.totalorder %s22, 0
      %p127 = por %p125, %p126
      %p128 = scmp.ne.s32.totalorder %s116, %s117
      %p129 = scmp.eq.s32.totalorder %s23, 1
      %p130 = por %p128, %p129
      %p132 = scmp.ne.s32.totalorder %s117, %s131
      %p133 = scmp.eq.s32.totalorder %s23, 0
      %p134 = por %p132, %p133
      %s135 = ssub.s32 %s17, %s24
      %p136 = scmp.eq.s32.totalorder %s135, 0
      %s138 = sadd.s32 %s137, 1
      %s139 = scalar_select %p136, %s137, %s138
      %p142 = pneg %p136
      %p143 = scmp.eq.s32.totalorder %s17, 1
      %p144 = por %p142, %p143
      %p145 = scmp.ne.s32.totalorder %s137, %s140
      %p146 = scmp.eq.s32.totalorder %s17, 0
      %p147 = por %p145, %p146
      %p148 = scmp.ne.s32.totalorder %s137, %s140
      %p149 = scmp.eq.s32.totalorder %s22, 1
      %p150 = por %p148, %p149
      %p151 = scmp.ne.s32.totalorder %s140, %s141
      %p152 = scmp.eq.s32.totalorder %s22, 0
      %p153 = por %p151, %p152
      %p154 = scmp.ne.s32.totalorder %s140, %s141
      %p155 = scmp.eq.s32.totalorder %s23, 1
      %p156 = por %p154, %p155
      %p158 = scmp.ne.s32.totalorder %s141, %s157
      %p159 = scmp.eq.s32.totalorder %s23, 0
      %p160 = por %p158, %p159
      %p161 = scmp.le.s32.totalorder 1, %s17
      %p162 = scmp.lt.s32.totalorder %s17, 3
      %p163 = pnand %p161, %p162
      %p164 = pneg %p163
      // Predicated region
      $region9: #{tpu_custom_call.1} parent=5 // pred_check
        _
      $region10: #{tpu_custom_call.1} parent=5 // pred_check_branch
        %166 = sbr.rel (%p163) target = $region12
      $region11: #{tpu_custom_call.1} parent=5 // pred_region
        %s167 = ssub.s32 %s17, 1
        // Predicated region
        $region13: #{tpu_custom_call.1} parent=11 // pred_check
          %p168 = pneg %p64
        $region14: #{tpu_custom_call.1} parent=11 // pred_check_branch
          %170 = sbr.rel (%p168) target = $region16
        $region15: #{tpu_custom_call.1} parent=11 // pred_region
          _
        $region16: #{tpu_custom_call.1} parent=11 // pred_fallthru
          _
        // Predicated region
        $region17: #{tpu_custom_call.1} parent=11 // pred_check
          %p171 = pneg %p85
        $region18: #{tpu_custom_call.1} parent=11 // pred_check_branch
          %173 = sbr.rel (%p171) target = $region20
        $region19: #{tpu_custom_call.1} parent=11 // pred_region
          _
        $region20: #{tpu_custom_call.1} parent=11 // pred_fallthru
          _
        // Predicated region
        $region21: #{tpu_custom_call.1} parent=11 // pred_check
          %p174 = pneg %p106
        $region22: #{tpu_custom_call.1} parent=11 // pred_check_branch
          %176 = sbr.rel (%p174) target = $region24
        $region23: #{tpu_custom_call.1} parent=11 // pred_region
          _
        $region24: #{tpu_custom_call.1} parent=11 // pred_fallthru
          _
        // Predicated region
        $region25: #{tpu_custom_call.1} parent=11 // pred_check
          %p177 = pneg %p127
        $region26: #{tpu_custom_call.1} parent=11 // pred_check_branch
          %179 = sbr.rel (%p177) target = $region28
        $region27: #{tpu_custom_call.1} parent=11 // pred_region
          _
        $region28: #{tpu_custom_call.1} parent=11 // pred_fallthru
          _
      $region12: #{tpu_custom_call.1} parent=5 // pred_fallthru
        _
      %p180 = scmp.lt.s32.totalorder %s17, 2
      // Predicated region
      $region29: #{tpu_custom_call.1} parent=5 // pred_check
        %p181 = pneg %p180
      $region30: #{tpu_custom_call.1} parent=5 // pred_check_branch
        %183 = sbr.rel (%p181) target = $region32
      $region31: #{tpu_custom_call.1} parent=5 // pred_region
        // Predicated region
        $region33: #{tpu_custom_call.1} parent=31 // pred_check
          %p184 = pneg %p37
        $region34: #{tpu_custom_call.1} parent=31 // pred_check_branch
          %186 = sbr.rel (%p184) target = $region36
        $region35: #{tpu_custom_call.1} parent=31 // pred_region
          %s187 = sand.u32 %s27, 1
          %s188 = scalar_lea.sflag [#allocation3], %s187
          %s189 = sand.u32 %s27, 1
          %s190 = smul.addr %s189, 64
          %s191 = scalar_lea.vmem [#allocation2], %s190
          %s193 = ssub.s32 1024, 1024
          %194 = vsyncadd %s188, %s193
          %s195 = smul.addr %s17, 8
          %s196 = smul.addr %s195, 128
          %s197 = scalar_lea.hbm %s0, %s196
          %s198 = sshll.u32 %s191, 4
          %s199 = int_to_ptr.vmem [resolvable:$true] %s198
          %204 = dma.hbm_to_vmem [thread:$0]  %s197, 1024, %s199, %s188, 256, 256, 16
        $region36: #{tpu_custom_call.1} parent=31 // pred_fallthru
          _
      $region32: #{tpu_custom_call.1} parent=5 // pred_fallthru
        _
      %p205 = scmp.le.s32.totalorder 1, %s17
      %p206 = scmp.lt.s32.totalorder %s17, 3
      %p207 = pnand %p205, %p206
      %p208 = pneg %p207
      // Predicated region
      $region37: #{tpu_custom_call.1} parent=5 // pred_check
        _
      $region38: #{tpu_custom_call.1} parent=5 // pred_check_branch
        %210 = sbr.rel (%p207) target = $region40
      $region39: #{tpu_custom_call.1} parent=5 // pred_region
        %s211 = ssub.s32 %s17, 1
        %s212 = sand.u32 %s30, 1
        %s213 = scalar_lea.sflag [#allocation3], %s212
        %s214 = sand.u32 %s30, 1
        %s215 = smul.addr %s214, 64
        %s216 = scalar_lea.vmem [#allocation2], %s215
        // Predicated region
        $region41: #{tpu_custom_call.1} parent=39 // pred_check
          %p217 = pneg %p43
        $region42: #{tpu_custom_call.1} parent=39 // pred_check_branch
          %219 = sbr.rel (%p217) target = $region44
        $region43: #{tpu_custom_call.1} parent=39 // pred_region
          %220 = dma.done %s213, 1024
        $region44: #{tpu_custom_call.1} parent=39 // pred_fallthru
          _
        %s221 = sand.u32 %s30, 1
        %s222 = scalar_lea.sflag [#allocation3], %s221
        %s223 = sand.u32 %s30, 1
        %s224 = smul.addr %s223, 64
        %s225 = scalar_lea.vmem [#allocation2], %s224
        %p226 = pneg %p43
        %p227 = pneg %p40
        %p228 = pneg %p64
        %p229 = pneg %p61
        %p230 = pneg %p85
        %p231 = pneg %p82
        %p232 = pneg %p106
        %p233 = pneg %p103
        %p234 = pneg %p127
        %p235 = pneg %p124
        %p236 = pneg %p153
        %p237 = pneg %p150
        %s238 = sand.u32 %s140, 1
        %s239 = scalar_lea.sflag [#allocation4], %s238
        %s240 = sand.u32 %s140, 1
        %s241 = smul.addr %s240, 64
        %s242 = scalar_lea.vmem [#allocation5], %s241
        %v243 = vld [vmem:[%s216] sm:$0xff]
        %v244 = vld [vmem:[%s216 + $0x8] sm:$0xff]
        %v245 = vld [vmem:[%s216 + $0x10] sm:$0xff]
        %v246 = vld [vmem:[%s216 + $0x18] sm:$0xff]
        %v247 = vld [vmem:[%s216 + $0x20] sm:$0xff]
        %v248 = vld [vmem:[%s216 + $0x28] sm:$0xff]
        %v249 = vld [vmem:[%s216 + $0x30] sm:$0xff]
        %v250 = vld [vmem:[%s216 + $0x38] sm:$0xff]
        %v251 = vadd.f32 %v243, %v244
        %252 = vadd.xlane.f32.xlu0 %v251
        %v253 = vpop.xlane.xlu0 %252
        %v254 = vadd.f32 %v245, %v246
        %255 = vadd.xlane.f32.xlu0 %v254
        %v256 = vpop.xlane.xlu0 %255
        %v257 = vadd.f32 %v247, %v248
        %258 = vadd.xlane.f32.xlu0 %v257
        %v259 = vpop.xlane.xlu0 %258
        %v260 = vadd.f32 %v249, %v250
        %261 = vadd.xlane.f32.xlu0 %v260
        %v262 = vpop.xlane.xlu0 %261
        %v263 = vld [vmem:[%s1] sm:$0xff]
        %v264 = vld [vmem:[%s1 + $0x8] sm:$0xff]
        %v265 = vld [vmem:[%s1 + $0x10] sm:$0xff]
        %v266 = vld [vmem:[%s1 + $0x18] sm:$0xff]
        %v267 = vld [vmem:[%s2] sm:$0x1]
        %v272 = vlaneseq
        %v273 = vand.u32 %v272, 127
        %v274 = vlaneseq
        %v275 = vshrl.u32 %v274, 7
        %v276 = vsub.s32 %v273, %v275
        %v277 = vrot.slane %v253, %v276
        %v278 = vadd.s32 %v273, 4294967288
        %v279 = vlaneseq
        %v280 = vshrl.u32 %v279, 7
        %v281 = vsub.s32 %v278, %v280
        %v282 = vrot.slane %v256, %v281
        %vm283 = vcmask 130112
        %v284 = vsel %vm283, %v282, %v277
        %v285 = vadd.s32 %v273, 4294967280
        %v286 = vlaneseq
        %v287 = vshrl.u32 %v286, 7
        %v288 = vsub.s32 %v285, %v287
        %v289 = vrot.slane %v259, %v288
        %vm290 = vcmask 195712
        %v291 = vsel %vm290, %v289, %v284
        %v292 = vadd.s32 %v273, 4294967272
        %v293 = vlaneseq
        %v294 = vshrl.u32 %v293, 7
        %v295 = vsub.s32 %v292, %v294
        %v296 = vrot.slane %v262, %v295
        %vm297 = vcmask 261312
        %v298 = vsel %vm297, %v296, %v291
        %vm299 = vcmask 261120
        %v300 = vsel %vm299, %v298, 0
        %302 = vmatprep.subr.mxu0 0.0
        %303 = vmatpush1.msra.mxu0 %v263
        %304 = vmatprep.subr.mxu0 0.0
        %305 = vmatpush1.msra.mxu0 %v264
        %306 = vmatprep.subr.mxu0 0.0
        %307 = vmatpush1.msra.mxu0 %v265
        %308 = vmatprep.subr.mxu0 0.0
        %309 = vmatpush1.msra.mxu0 %v266
        %310 = vmatprep.subr.mxu0 0.0
        %311 = vmatpush1.msra.mxu0 0.0
        %312 = vmatprep.subr.mxu0 0.0
        %313 = vmatpush1.msra.mxu0 0.0
        %314 = vmatprep.subr.mxu0 0.0
        %315 = vmatpush1.msra.mxu0 0.0
        %316 = vmatprep.subr.mxu0 0.0
        %317 = vmatpush1.msra.mxu0 0.0
        %318 = vmatprep.subr.mxu0 0.0
        %319 = vmatpush1.msra.mxu0 0.0
        %320 = vmatprep.subr.mxu0 0.0
        %321 = vmatpush1.msra.mxu0 0.0
        %322 = vmatprep.subr.mxu0 0.0
        %323 = vmatpush1.msra.mxu0 0.0
        %324 = vmatprep.subr.mxu0 0.0
        %325 = vmatpush1.msra.mxu0 0.0
        %326 = vmatprep.subr.mxu0 0.0
        %327 = vmatpush1.msra.mxu0 0.0
        %328 = vmatprep.subr.mxu0 0.0
        %329 = vmatpush1.msra.mxu0 0.0
        %330 = vmatprep.subr.mxu0 0.0
        %331 = vmatpush1.msra.mxu0 0.0
        %332 = vmatprep.subr.mxu0 0.0
        %333 = vmatpush1.msra.mxu0 0.0
        %334 = vmatprep.subr.mxu0 0.0
        %335 = vmatpush1.msra.mxu0 0.0
        %336 = vmatprep.subr.mxu0 0.0
        %337 = vmatpush1.msra.mxu0 0.0
        %338 = vmatprep.subr.mxu0 0.0
        %339 = vmatpush1.msra.mxu0 0.0
        %340 = vmatprep.subr.mxu0 0.0
        %341 = vmatpush1.msra.mxu0 0.0
        %342 = vmatprep.subr.mxu0 0.0
        %343 = vmatpush1.msra.mxu0 0.0
        %344 = vmatprep.subr.mxu0 0.0
        %345 = vmatpush1.msra.mxu0 0.0
        %346 = vmatprep.subr.mxu0 0.0
        %347 = vmatpush1.msra.mxu0 0.0
        %348 = vmatprep.subr.mxu0 0.0
        %349 = vmatpush1.msra.mxu0 0.0
        %350 = vmatprep.subr.mxu0 0.0
        %351 = vmatpush1.msra.mxu0 0.0
        %352 = vmatprep.subr.mxu0 0.0
        %353 = vmatpush1.msra.mxu0 0.0
        %354 = vmatprep.subr.mxu0 0.0
        %355 = vmatpush1.msra.mxu0 0.0
        %356 = vmatprep.subr.mxu0 0.0
        %357 = vmatpush1.msra.mxu0 0.0
        %358 = vmatprep.subr.mxu0 0.0
        %359 = vmatpush1.msra.mxu0 0.0
        %360 = vmatprep.subr.mxu0 0.0
        %361 = vmatpush1.msra.mxu0 0.0
        %362 = vmatprep.subr.mxu0 0.0
        %363 = vmatpush1.msra.mxu0 0.0
        %364 = vmatprep.subr.mxu0 0.0
        %365 = vmatpush1.msra.mxu0 0.0
        %366 = vmatprep.mubr.f32.mxu0 0.0
        %367 = vmatmul.mubr.f32.gmra.mrb[0].mxu0 %v300
        %v368 = vpop.f32.mrb[0].mxu0
        %v369 = vadd.f32 %v267, %v368
        %v370 = vpop.f32.mrb[0].mxu0
        %371 = vdwg.mxu0
        %v372 = vmax.f32 %v369, 0.0
        %v373 = vld [vmem:[%s3] sm:$0x3]
        %v374 = vld [vmem:[%s4] sm:$0x1]
        %vm375 = vcmask 15360
        %v377 = vsel %vm375, %v372, 0
        %vm379 = vcmask 1041408
        %v381 = vsel %vm379, %v373, 0
        %383 = vmatprep.subr.mxu0 0.0
        %384 = vmatpush1.msra.mxu0 %v381
        %385 = vmatprep.subr.mxu0 0.0
        %386 = vmatpush1.msra.mxu0 0.0
        %387 = vmatprep.subr.mxu0 0.0
        %388 = vmatpush1.msra.mxu0 0.0
        %389 = vmatprep.subr.mxu0 0.0
        %390 = vmatpush1.msra.mxu0 0.0
        %391 = vmatprep.subr.mxu0 0.0
        %392 = vmatpush1.msra.mxu0 0.0
        %393 = vmatprep.subr.mxu0 0.0
        %394 = vmatpush1.msra.mxu0 0.0
        %395 = vmatprep.subr.mxu0 0.0
        %396 = vmatpush1.msra.mxu0 0.0
        %397 = vmatprep.subr.mxu0 0.0
        %398 = vmatpush1.msra.mxu0 0.0
        %399 = vmatprep.subr.mxu0 0.0
        %400 = vmatpush1.msra.mxu0 0.0
        %401 = vmatprep.subr.mxu0 0.0
        %402 = vmatpush1.msra.mxu0 0.0
        %403 = vmatprep.subr.mxu0 0.0
        %404 = vmatpush1.msra.mxu0 0.0
        %405 = vmatprep.subr.mxu0 0.0
        %406 = vmatpush1.msra.mxu0 0.0
        %407 = vmatprep.subr.mxu0 0.0
        %408 = vmatpush1.msra.mxu0 0.0
        %409 = vmatprep.subr.mxu0 0.0
        %410 = vmatpush1.msra.mxu0 0.0
        %411 = vmatprep.subr.mxu0 0.0
        %412 = vmatpush1.msra.mxu0 0.0
        %413 = vmatprep.subr.mxu0 0.0
        %414 = vmatpush1.msra.mxu0 0.0
        %415 = vmatprep.subr.mxu0 0.0
        %416 = vmatpush1.msra.mxu0 0.0
        %417 = vmatprep.subr.mxu0 0.0
        %418 = vmatpush1.msra.mxu0 0.0
        %419 = vmatprep.subr.mxu0 0.0
        %420 = vmatpush1.msra.mxu0 0.0
        %421 = vmatprep.subr.mxu0 0.0
        %422 = vmatpush1.msra.mxu0 0.0
        %423 = vmatprep.subr.mxu0 0.0
        %424 = vmatpush1.msra.mxu0 0.0
        %425 = vmatprep.subr.mxu0 0.0
        %426 = vmatpush1.msra.mxu0 0.0
        %427 = vmatprep.subr.mxu0 0.0
        %428 = vmatpush1.msra.mxu0 0.0
        %429 = vmatprep.subr.mxu0 0.0
        %430 = vmatpush1.msra.mxu0 0.0
        %431 = vmatprep.subr.mxu0 0.0
        %432 = vmatpush1.msra.mxu0 0.0
        %433 = vmatprep.subr.mxu0 0.0
        %434 = vmatpush1.msra.mxu0 0.0
        %435 = vmatprep.subr.mxu0 0.0
        %436 = vmatpush1.msra.mxu0 0.0
        %437 = vmatprep.subr.mxu0 0.0
        %438 = vmatpush1.msra.mxu0 0.0
        %439 = vmatprep.subr.mxu0 0.0
        %440 = vmatpush1.msra.mxu0 0.0
        %441 = vmatprep.subr.mxu0 0.0
        %442 = vmatpush1.msra.mxu0 0.0
        %443 = vmatprep.subr.mxu0 0.0
        %444 = vmatpush1.msra.mxu0 0.0
        %445 = vmatprep.subr.mxu0 0.0
        %446 = vmatpush1.msra.mxu0 0.0
        %447 = vmatprep.mubr.f32.mxu0 0.0
        %448 = vmatmul.mubr.f32.gmra.mrb[0].mxu0 %v377
        %v449 = vpop.f32.mrb[0].mxu0
        %v450 = vadd.f32 %v374, %v449
        %v451 = vpop.f32.mrb[0].mxu0
        %452 = vdwg.mxu0
        %v453 = vxor.u32 %v450, 2147483648
        %v454 = vmul.f32 %v453, 1.442695
        %v455 = vpow.pop %v454
        %v456 = vadd.f32 %v455, 1.0
        %v457 = vrcp.pop %v456
        %v458 = vmul.f32 1.0, %v457
        %v459 = vlaneseq
        %v460 = vshrl.u32 %v459, 7
        %v461 = vsub.s32 0, %v460
        %v462 = vrot.slane %v458, %v461
        %464 = vbcast.lane.b32.xlu0 %v462, 256
        %v465 = vpop.permute.xlu0 %464
        %s467 = sor.u32 256, 8
        %468 = vbcast.lane.b32.xlu0 %v462, %s467
        %v469 = vpop.permute.xlu0 %468
        %s471 = sor.u32 256, 16
        %472 = vbcast.lane.b32.xlu0 %v462, %s471
        %v473 = vpop.permute.xlu0 %472
        %s475 = sor.u32 256, 24
        %476 = vbcast.lane.b32.xlu0 %v462, %s475
        %v477 = vpop.permute.xlu0 %476
        %v478 = vmul.f32 %v243, %v465
        %v479 = vmul.f32 %v244, %v465
        %v480 = vmul.f32 %v245, %v469
        %v481 = vmul.f32 %v246, %v469
        %v482 = vmul.f32 %v247, %v473
        %v483 = vmul.f32 %v248, %v473
        %v484 = vmul.f32 %v249, %v477
        %v485 = vmul.f32 %v250, %v477
        %486 = vst [vmem:[%s242] sm:$0xff] %v478
        %487 = vst [vmem:[%s242 + $0x8] sm:$0xff] %v479
        %488 = vst [vmem:[%s242 + $0x10] sm:$0xff] %v480
        %489 = vst [vmem:[%s242 + $0x18] sm:$0xff] %v481
        %490 = vst [vmem:[%s242 + $0x20] sm:$0xff] %v482
        %491 = vst [vmem:[%s242 + $0x28] sm:$0xff] %v483
        %492 = vst [vmem:[%s242 + $0x30] sm:$0xff] %v484
        %493 = vst [vmem:[%s242 + $0x38] sm:$0xff] %v485
        %s494 = sand.u32 %s140, 1
        %s495 = scalar_lea.sflag [#allocation4], %s494
        %s496 = sand.u32 %s140, 1
        %s497 = smul.addr %s496, 64
        %s498 = scalar_lea.vmem [#allocation5], %s497
        // Predicated region
        $region45: #{tpu_custom_call.1} parent=39 // pred_check
          %p499 = pneg %p150
        $region46: #{tpu_custom_call.1} parent=39 // pred_check_branch
          %501 = sbr.rel (%p499) target = $region48
        $region47: #{tpu_custom_call.1} parent=39 // pred_region
          %s503 = ssub.s32 1024, 1024
          %504 = vsyncadd %s495, %s503
          %s505 = smul.addr %s22, 8
          %s506 = smul.addr %s505, 128
          %s507 = scalar_lea.hbm %s5, %s506
          %s508 = sshll.u32 %s498, 4
          %s509 = int_to_ptr.vmem [resolvable:$true] %s508
          %514 = dma.vmem_to_hbm [thread:$0]  %s509, 1024, %s507, %s495, 256, 256, 16
        $region48: #{tpu_custom_call.1} parent=39 // pred_fallthru
          _
      $region40: #{tpu_custom_call.1} parent=5 // pred_fallthru
        _
      %p515 = scmp.le.s32.totalorder 2, %s17
      // Predicated region
      $region49: #{tpu_custom_call.1} parent=5 // pred_check
        %p516 = pneg %p515
      $region50: #{tpu_custom_call.1} parent=5 // pred_check_branch
        %518 = sbr.rel (%p516) target = $region52
      $region51: #{tpu_custom_call.1} parent=5 // pred_region
        %s519 = ssub.s32 %s17, 2
        // Predicated region
        $region53: #{tpu_custom_call.1} parent=51 // pred_check
          %p520 = pneg %p156
        $region54: #{tpu_custom_call.1} parent=51 // pred_check_branch
          %522 = sbr.rel (%p520) target = $region56
        $region55: #{tpu_custom_call.1} parent=51 // pred_region
          %s523 = sand.u32 %s141, 1
          %s524 = scalar_lea.sflag [#allocation4], %s523
          %s525 = sand.u32 %s141, 1
          %s526 = smul.addr %s525, 64
          %s527 = scalar_lea.vmem [#allocation5], %s526
          %528 = dma.done %s524, 1024
        $region56: #{tpu_custom_call.1} parent=51 // pred_fallthru
          _
      $region52: #{tpu_custom_call.1} parent=5 // pred_fallthru
        _
    $region6: #{tpu_custom_call.1} parent=1 // loop_footer
      %s21 = sadd.s32 1, %s17
    $region7: #{tpu_custom_call.1} parent=1 // loop_footer_branch
      %16 = sbr.rel target = $region3
    $region8: #{tpu_custom_call.1} parent=1 // loop_exit
      _
    %529 = vsyncpa [#allocation3], 1
    %s530 = scalar_lea.sflag [#allocation3], 1
    %531 = vsyncpa %s530, 1
    %532 = vsyncpa [#allocation4], 1
    %s533 = scalar_lea.sflag [#allocation4], 1
    %534 = vsyncpa %s533, 1

</llo_original>
